<compile_context>
chip_gen: v6e
topology: v6e:2x2x1
jax: 0.10.0
libtpu: 0.0.40
codegen_flags: <defaults>
</compile_context>

<pallas_src>
import jax
import jax.numpy as jnp
import numpy as np
from jax.experimental import pallas as pl
from jax.experimental.pallas import tpu as pltpu


# ----------------------------------------------------------------------------
# Pallas kernel: one (tb x tn) output tile of  y = (x @ W.T) * inv_factor + b
# accumulated over the K (in_features) grid axis.
# ----------------------------------------------------------------------------
def _induced_norm_linear_kernel(inv_ref, x_ref, w_ref, b_ref, o_ref, acc_ref):
    # inv_ref : (1, 1) f32 in SMEM  -- precomputed 1 / max(1, sigma/coeff)
    # x_ref   : (tb, tk)            -- batch x K tile of the input
    # w_ref   : (tn, tk)            -- out-rows x K tile of the weight
    # b_ref   : (1, tn)             -- bias tile
    # o_ref   : (tb, tn)            -- output tile (resident across K axis)
    # acc_ref : (tb, tn) f32 VMEM scratch accumulator
    k = pl.program_id(2)

    @pl.when(k == 0)
    def _init():
        acc_ref[...] = jnp.zeros_like(acc_ref)

    # Contract x dim 1 with w dim 1 -> MXU-native (no in-kernel transpose),
    # f32 accumulation via preferred_element_type.
    acc_ref[...] += jax.lax.dot_general(
        x_ref[...],
        w_ref[...],
        dimension_numbers=(((1,), (1,)), ((), ())),
        preferred_element_type=jnp.float32,
    )

    @pl.when(k == pl.num_programs(2) - 1)
    def _finalize():
        inv_factor = inv_ref[0, 0]
        o_ref[...] = (acc_ref[...] * inv_factor
                      + b_ref[...].astype(jnp.float32)).astype(o_ref.dtype)


def _round_up(a, m):
    return (a + m - 1) // m * m


def _sublane_multiple(dtype):
    return {4: 8, 2: 16, 1: 32}.get(jnp.dtype(dtype).itemsize, 8)


def compute_inv_factor(weight, u, v, coeff=0.97):
    """1 / max(1, (u . W v) / coeff).  W, u, v are fixed in eval mode, so this
    can be computed once and cached alongside the parameters."""
    wv = jnp.einsum("oi,i->o", weight, v, preferred_element_type=jnp.float32)
    sigma = jnp.dot(u.astype(jnp.float32), wv)
    factor = jnp.maximum(jnp.float32(1.0), sigma / jnp.float32(coeff))
    return (jnp.float32(1.0) / factor).reshape(1, 1)


def induced_norm_linear_forward(x, weight, u=None, v=None, bias=None, *,
                                coeff=0.97, inv_factor=None, max_tk=2048):
    """Pallas forward of InducedNormLinear1 (eval mode).

    x:      (batch, in_features)
    weight: (out_features, in_features)
    u: (out_features,)  v: (in_features,)  bias: (out_features,) or None
    inv_factor: optional precomputed (1,1) f32 scalar (caches sigma work).
    """
    n, in_f = x.shape
    out_f, in_f2 = weight.shape
    assert in_f == in_f2, "weight / input feature mismatch"

    if inv_factor is None:
        inv_factor = compute_inv_factor(weight, u, v, coeff)
    inv_factor = jnp.asarray(inv_factor, jnp.float32).reshape(1, 1)

    # Explicit dtype promotion: feed the MXU a single dtype.
    cdtype = jnp.result_type(x.dtype, weight.dtype)
    x = x.astype(cdtype)
    weight = weight.astype(cdtype)
    if bias is None:
        bias = jnp.zeros((out_f,), cdtype)
    bias = bias.astype(cdtype)
    isz = jnp.dtype(cdtype).itemsize
    sub = _sublane_multiple(cdtype)

    # ---- K (in_features) tiling: VMEM decoupled from in_features ----------
    max_tk = max(int(max_tk), 128)
    in_f_p = _round_up(in_f, 128)
    if in_f_p <= max_tk:
        tk = in_f_p
    else:
        tk = next(c for c in (2048, 1024, 512, 256, 128) if c <= max_tk)
        in_f_p = _round_up(in_f_p, tk)
    nk = in_f_p // tk

    # ---- out tiling: MXU-native widths, lane-dense output -----------------
    out_p = _round_up(out_f, 128)
    tn = 256 if out_p % 256 == 0 else 128
    nj = out_p // tn

    # ---- batch tiling: no over-padding to a 512-row tile -------------------
    if n <= 512:
        n_p = _round_up(n, sub)
        tb = n_p
    else:
        n_p = _round_up(n, 128)
        tb = 512 if n_p % 512 == 0 else (256 if n_p % 256 == 0 else 128)
    ni = n_p // tb

    # ---- pad operands (zero pads are sliced away / contribute 0 to dots) ---
    x_p = x if (n_p, in_f_p) == (n, in_f) else jnp.pad(
        x, ((0, n_p - n), (0, in_f_p - in_f)))
    w_p = weight if (out_p, in_f_p) == (out_f, in_f) else jnp.pad(
        weight, ((0, out_p - out_f), (0, in_f_p - in_f)))
    b_p = bias if out_p == out_f else jnp.pad(bias, (0, out_p - out_f))
    b_p = b_p.reshape(1, out_p)

    # ---- grid ordering: minimize HBM re-streaming / megacore duplication ---
    x_bytes = n_p * in_f_p * isz
    w_bytes = out_p * in_f_p * isz
    if nk == 1:
        # Operand with a constant block index across the inner sweep is read
        # once (Pallas elides the redundant DMA); pick the cheaper order.
        batch_outer = (x_bytes + ni * w_bytes) <= (w_bytes + nj * x_bytes)
    else:
        # With K innermost, re-stream traffic is ni*|W| + nj*|x| either way;
        # choose the leading axis (split across v7x's 2 TCs) so the operand
        # duplicated on both cores is the smaller one.
        batch_outer = w_bytes <= x_bytes

    if batch_outer:
        grid = (ni, nj, nk)
        x_map = lambda i, j, k: (i, k)
        w_map = lambda i, j, k: (j, k)
        b_map = lambda i, j, k: (0, j)
        o_map = lambda i, j, k: (i, j)
    else:
        grid = (nj, ni, nk)
        x_map = lambda j, i, k: (i, k)
        w_map = lambda j, i, k: (j, k)
        b_map = lambda j, i, k: (0, j)
        o_map = lambda j, i, k: (i, j)

    # Double-buffered footprint (worst case tb=512, tn=256, tk=2048, f32) is
    # ~14 MiB — comfortably inside the default scoped VMEM on v5e/v6e/v7x, so
    # no vmem_limit_bytes override is needed.
    cost = pl.CostEstimate(
        flops=2 * n_p * in_f_p * out_p,
        transcendentals=0,
        bytes_accessed=int(x_p.size * isz + w_p.size * isz + b_p.size * isz
                           + n_p * out_p * isz),
    )

    out = pl.pallas_call(
        _induced_norm_linear_kernel,
        out_shape=jax.ShapeDtypeStruct((n_p, out_p), cdtype),
        grid=grid,
        in_specs=[
            pl.BlockSpec(memory_space=pltpu.MemorySpace.SMEM),   # inv_factor
            pl.BlockSpec((tb, tk), x_map),                       # x tile
            pl.BlockSpec((tn, tk), w_map),                       # weight tile
            pl.BlockSpec((1, tn), b_map),                        # bias tile
        ],
        out_specs=pl.BlockSpec((tb, tn), o_map),
        scratch_shapes=[pltpu.VMEM((tb, tn), jnp.float32)],
        compiler_params=pltpu.CompilerParams(
            dimension_semantics=("parallel", "parallel", "arbitrary")),
        cost_estimate=cost,
    )(inv_factor, x_p, w_p, b_p)

    return out[:n, :out_f]


# ----------------------------------------------------------------------------
# Parameter setup (plain JAX glue, deterministic):
#   kaiming-uniform weight, uniform bias, and the 200-step power iteration
#   that InducedNormLinear1.__init__ runs for domain=codomain=2.
# ----------------------------------------------------------------------------
# TODO(synk): training-mode update (compute_weight(update=True) with atol/rtol
# early exit) and non-L2 domain/codomain normalizations are host-side
# parameter maintenance, not part of the eval forward, so they stay in plain
# JAX setup code rather than the kernel.
def _l2_normalize(x, eps=1e-12):
    return x / jnp.maximum(jnp.sqrt(jnp.sum(x * x)), eps)


def make_params(key, in_features, out_features):
    kw, kb, ku, kv = jax.random.split(key, 4)
    bound = 1.0 / np.sqrt(in_features)  # kaiming_uniform(a=sqrt(5)) -> 1/sqrt(fan_in)
    weight = jax.random.uniform(
        kw, (out_features, in_features), jnp.float32, minval=-bound, maxval=bound)
    bias = jax.random.uniform(
        kb, (out_features,), jnp.float32, minval=-bound, maxval=bound)
    u0 = _l2_normalize(jax.random.normal(ku, (out_features,), jnp.float32))
    v0 = _l2_normalize(jax.random.normal(kv, (in_features,), jnp.float32))

    def body(_, uv):
        u, v = uv
        u = _l2_normalize(weight @ v)
        v = _l2_normalize(weight.T @ u)
        return (u, v)

    u, v = jax.lax.fori_loop(0, 200, body, (u0, v0))
    return weight, bias, u, v


def reference_forward(x, weight, u, v, bias, coeff=0.97):
    sigma = jnp.dot(u, weight @ v)
    factor = jnp.maximum(jnp.float32(1.0), sigma / coeff)
    return x @ (weight / factor).T + bias


if __name__ == "__main__":
    key = jax.random.PRNGKey(0)
    k1, k2, kp1, kp2 = jax.random.split(key, 4)

    # Case 1: small shapes, single K block, u/v passed directly.
    in_f, out_f, batch = 32, 16, 16
    w1, b1, u1, v1 = make_params(kp1, in_f, out_f)
    x1 = jax.random.normal(k1, (batch, in_f), jnp.float32)
    y1 = jax.block_until_ready(
        induced_norm_linear_forward(x1, w1, u1, v1, b1, coeff=0.97))
    y1_ref = jax.block_until_ready(reference_forward(x1, w1, u1, v1, b1, 0.97))
    np.testing.assert_allclose(np.asarray(y1), np.asarray(y1_ref),
                               rtol=1e-5, atol=1e-4)

    # Case 2: ragged shapes + cached inv_factor + forced K-tiling (max_tk=128)
    # to exercise the accumulator init/finalize path and padding logic.
    in_f2, out_f2, batch2 = 384, 160, 200
    w2, b2, u2, v2 = make_params(kp2, in_f2, out_f2)
    x2 = jax.random.normal(k2, (batch2, in_f2), jnp.float32)
    inv_f2 = compute_inv_factor(w2, u2, v2, coeff=0.97)   # cached once
    y2 = jax.block_until_ready(
        induced_norm_linear_forward(x2, w2, bias=b2, coeff=0.97,
                                    inv_factor=inv_f2, max_tk=128))
    y2_ref = jax.block_until_ready(reference_forward(x2, w2, u2, v2, b2, 0.97))
    np.testing.assert_allclose(np.asarray(y2), np.asarray(y2_ref),
                               rtol=1e-5, atol=1e-4)

    print("KERNEL_OK")
</pallas_src>

<mosaic_0001>
module attributes {stable_mosaic.version = 11 : i64} {
  func.func @_induced_norm_linear_kernel(%arg0: i32, %arg1: i32, %arg2: i32, %arg3: memref<1x1xf32, #tpu.memory_space<smem>>, %arg4: memref<16x128xf32, #tpu.memory_space<vmem>>, %arg5: memref<128x128xf32, #tpu.memory_space<vmem>>, %arg6: memref<1x128xf32, #tpu.memory_space<vmem>>, %arg7: memref<16x128xf32, #tpu.memory_space<vmem>>, %arg8: memref<16x128xf32, #tpu.memory_space<vmem>>) attributes {dimension_semantics = [#tpu.dimension_semantics<parallel>, #tpu.dimension_semantics<parallel>, #tpu.dimension_semantics<arbitrary>], iteration_bounds = array<i64: 1, 1, 1>, scalar_prefetch = 0 : i64, scratch_operands = 1 : i64, tpu.core_type = #tpu.core_type<tc>, window_params = [{transform_indices = @transform_0, window_bounds = array<i64: 1, 1>}, {transform_indices = @transform_1, window_bounds = array<i64: 16, 128>}, {transform_indices = @transform_2, window_bounds = array<i64: 128, 128>}, {transform_indices = @transform_3, window_bounds = array<i64: 1, 128>}, {transform_indices = @transform_4, window_bounds = array<i64: 16, 128>}]} {
    %c0_i32 = arith.constant 0 : i32
    %0 = arith.cmpi eq, %arg2, %c0_i32 : i32
    %1 = arith.extui %0 : i1 to i32
    %c0_i32_0 = arith.constant 0 : i32
    %2 = arith.cmpi ne, %1, %c0_i32_0 : i32
    scf.if %2 {
      %cst_10 = arith.constant 0.000000e+00 : f32
      %12 = vector.broadcast %cst_10 : f32 to vector<16x128xf32>
      %c0_11 = arith.constant 0 : index
      %c0_12 = arith.constant 0 : index
      %13 = vector.load %arg8[%c0_11, %c0_12] : memref<16x128xf32, #tpu.memory_space<vmem>>, vector<16x128xf32>
      tpu.vector_store %arg8[%c0_11, %c0_12], %12 {strides = array<i32>} : memref<16x128xf32, #tpu.memory_space<vmem>>, vector<16x128xf32>,
    } else {
    }
    %c0 = arith.constant 0 : index
    %c0_1 = arith.constant 0 : index
    %3 = vector.load %arg8[%c0, %c0_1] : memref<16x128xf32, #tpu.memory_space<vmem>>, vector<16x128xf32>
    %c0_2 = arith.constant 0 : index
    %c0_3 = arith.constant 0 : index
    %4 = vector.load %arg4[%c0_2, %c0_3] : memref<16x128xf32, #tpu.memory_space<vmem>>, vector<16x128xf32>
    %c0_4 = arith.constant 0 : index
    %c0_5 = arith.constant 0 : index
    %5 = vector.load %arg5[%c0_4, %c0_5] : memref<128x128xf32, #tpu.memory_space<vmem>>, vector<128x128xf32>
    %cst = arith.constant dense<0.000000e+00> : vector<16x128xf32>
    %6 = tpu.matmul %4, %5, %cst {dimension_numbers = #tpu.dot_dimension_numbers<[1], [1], [0], [0], [0, 0, 1, 0], [], []>} : vector<16x128xf32>, vector<128x128xf32>, vector<16x128xf32> -> vector<16x128xf32>
    %7 = arith.addf %3, %6 : vector<16x128xf32>
    %c0_6 = arith.constant 0 : index
    %c0_7 = arith.constant 0 : index
    %8 = vector.load %arg8[%c0_6, %c0_7] : memref<16x128xf32, #tpu.memory_space<vmem>>, vector<16x128xf32>
    tpu.vector_store %arg8[%c0_6, %c0_7], %7 {strides = array<i32>} : memref<16x128xf32, #tpu.memory_space<vmem>>, vector<16x128xf32>,
    %c0_i32_8 = arith.constant 0 : i32
    %9 = arith.cmpi eq, %arg2, %c0_i32_8 : i32
    %10 = arith.extui %9 : i1 to i32
    %c0_i32_9 = arith.constant 0 : i32
    %11 = arith.cmpi ne, %10, %c0_i32_9 : i32
    scf.if %11 {
      %c0_10 = arith.constant 0 : index
      %c0_11 = arith.constant 0 : index
      %12 = memref.load %arg3[%c0_10, %c0_11] : memref<1x1xf32, #tpu.memory_space<smem>>
      %c0_12 = arith.constant 0 : index
      %c0_13 = arith.constant 0 : index
      %13 = vector.load %arg8[%c0_12, %c0_13] : memref<16x128xf32, #tpu.memory_space<vmem>>, vector<16x128xf32>
      %14 = vector.broadcast %12 : f32 to vector<16x128xf32>
      %15 = arith.mulf %13, %14 : vector<16x128xf32>
      %c0_14 = arith.constant 0 : index
      %c0_15 = arith.constant 0 : index
      %16 = vector.load %arg6[%c0_14, %c0_15] : memref<1x128xf32, #tpu.memory_space<vmem>>, vector<1x128xf32>
      %17 = vector.broadcast %16 : vector<1x128xf32> to vector<16x128xf32>
      %18 = arith.addf %15, %17 : vector<16x128xf32>
      %c0_16 = arith.constant 0 : index
      %c0_17 = arith.constant 0 : index
      %19 = vector.load %arg7[%c0_16, %c0_17] : memref<16x128xf32, #tpu.memory_space<vmem>>, vector<16x128xf32>
      tpu.vector_store %arg7[%c0_16, %c0_17], %18 {strides = array<i32>} : memref<16x128xf32, #tpu.memory_space<vmem>>, vector<16x128xf32>,
    } else {
    }
    return
  }
  func.func @transform_0(%arg0: i32, %arg1: i32, %arg2: i32) -> (i32, i32) {
    %c0_i32 = arith.constant 0 : i32
    %c0_i32_0 = arith.constant 0 : i32
    %c0_i32_1 = arith.constant 0 : i32
    return %c0_i32, %c0_i32_0 : i32, i32
  }
  func.func @transform_1(%arg0: i32, %arg1: i32, %arg2: i32) -> (i32, i32) {
    %c0_i32 = arith.constant 0 : i32
    return %arg0, %arg2 : i32, i32
  }
  func.func @transform_2(%arg0: i32, %arg1: i32, %arg2: i32) -> (i32, i32) {
    %c0_i32 = arith.constant 0 : i32
    return %arg1, %arg2 : i32, i32
  }
  func.func @transform_3(%arg0: i32, %arg1: i32, %arg2: i32) -> (i32, i32) {
    %c0_i32 = arith.constant 0 : i32
    %c0_i32_0 = arith.constant 0 : i32
    return %c0_i32, %arg1 : i32, i32
  }
  func.func @transform_4(%arg0: i32, %arg1: i32, %arg2: i32) -> (i32, i32) {
    %c0_i32 = arith.constant 0 : i32
    return %arg0, %arg1 : i32, i32
  }
}

</mosaic_0001>

<llo_original>
// kernel: tpu_custom_call.1
$region0: #{tpu_custom_call.1}
  #allocation0 [shape = 'u32[]', space=smem, size = 0x4, offset = 0x4, fixed_abs, tag = 'smem constant byte address 0x4 - core index']
  #allocation1 [shape = 'u32[144,128]{1,0:T(1,128)}', space=vmem, size = 0x12000, scoped, tag = 'internal scratch']
  #allocation2 [shape = 'f32[16,128]{1,0:T(8,128)}', space=vmem, size = 0x2000, scoped, tag = 'scratch operand']
  #allocation3 [shape = 'f32[1,1]{1,0:T(1,128)S(6)}', space=smem, size = 0x200, scoped, tag = 'scoped memory for tpu_custom_call.1']
  %s0 = inlined_call_operand.<no memory space> [shape: f32[1,1], index: 0, kind: input, shape index: {}]
  %s1 = inlined_call_operand.hbm [shape: f32[16,128], index: 1, kind: input, shape index: {}]
  %s2 = inlined_call_operand.hbm [shape: f32[128,128], index: 2, kind: input, shape index: {}]
  %s3 = inlined_call_operand.vmem [shape: f32[1,128], index: 3, kind: input, shape index: {}]
  %s4 = inlined_call_operand.hbm [shape: f32[16,128], index: 4, kind: output, shape index: {}]
  %s5 = sld [smem:[#allocation0]]
  $region42: #{tpu_custom_call.1} parent=0
    _
  %s7 = ssub.s32 1, %s5
  %s8 = scalar_select 0, %s7, %s5
  %9 = sst [smem:[#allocation3]] %s0
  $region1: #{tpu_custom_call.1} parent=0
    #allocation4 [shape = 'u8[8192]{0}', space=vmem, size = 0x2000, scoped, tag = 'input window, operand 1, single buffered']
    #allocation5 [shape = 's32[1]{0}', space=sflag, size = 0x4, scoped, tag = 'scoped memory for tpu_custom_call.1']
    #allocation6 [shape = 's32[1]{0}', space=sflag, size = 0x4, scoped, tag = 'scoped memory for tpu_custom_call.1']
    #allocation7 [shape = 'u8[65536]{0}', space=vmem, size = 0x10000, scoped, tag = 'input window, operand 2, single buffered']
    #allocation8 [shape = 's32[1]{0}', space=sflag, size = 0x4, scoped, tag = 'scoped memory for tpu_custom_call.1']
    #allocation9 [shape = 'u8[8192]{0}', space=vmem, size = 0x2000, scoped, tag = 'output window, operand 0, single buffered']
    %10 = vsyncpa [#allocation5], 0
    %11 = vsyncpa [#allocation8], 0
    %12 = vsyncpa [#allocation6], 0
    // Predicated region
    $region2: #{tpu_custom_call.1} parent=1 // pred_check
      _
    $region3: #{tpu_custom_call.1} parent=1 // pred_check_branch
      %14 = sbr.rel (0) target = $region5
    $region4: #{tpu_custom_call.1} parent=1 // pred_region
      _
    $region5: #{tpu_custom_call.1} parent=1 // pred_fallthru
      _
    // Predicated region
    $region6: #{tpu_custom_call.1} parent=1 // pred_check
      _
    $region7: #{tpu_custom_call.1} parent=1 // pred_check_branch
      %16 = sbr.rel (0) target = $region9
    $region8: #{tpu_custom_call.1} parent=1 // pred_region
      %s18 = ssub.s32 256, 256
      %19 = vsyncadd [#allocation5], %s18
      %s20 = sshll.u32 [#allocation4], 4
      %s21 = int_to_ptr.vmem [resolvable:$true] %s20
      %26 = dma.hbm_to_vmem [thread:$0]  %s1, 256, %s21, [#allocation5], 128, 128, 8
    $region9: #{tpu_custom_call.1} parent=1 // pred_fallthru
      _
    // Predicated region
    $region10: #{tpu_custom_call.1} parent=1 // pred_check
      _
    $region11: #{tpu_custom_call.1} parent=1 // pred_check_branch
      %28 = sbr.rel (0) target = $region13
    $region12: #{tpu_custom_call.1} parent=1 // pred_region
      %s30 = ssub.s32 2048, 2048
      %31 = vsyncadd [#allocation8], %s30
      %s32 = sshll.u32 [#allocation7], 4
      %s33 = int_to_ptr.vmem [resolvable:$true] %s32
      %38 = dma.hbm_to_vmem [thread:$0]  %s2, 2048, %s33, [#allocation8], 128, 128, 8
    $region13: #{tpu_custom_call.1} parent=1 // pred_fallthru
      _
    // Predicated region
    $region14: #{tpu_custom_call.1} parent=1 // pred_check
      _
    $region15: #{tpu_custom_call.1} parent=1 // pred_check_branch
      %40 = sbr.rel (0) target = $region17
    $region16: #{tpu_custom_call.1} parent=1 // pred_region
      _
    $region17: #{tpu_custom_call.1} parent=1 // pred_fallthru
      _
    // Predicated region
    $region18: #{tpu_custom_call.1} parent=1 // pred_check
      _
    $region19: #{tpu_custom_call.1} parent=1 // pred_check_branch
      %42 = sbr.rel (0) target = $region21
    $region20: #{tpu_custom_call.1} parent=1 // pred_region
      %43 = dma.done [#allocation5], 256
    $region21: #{tpu_custom_call.1} parent=1 // pred_fallthru
      _
    // Predicated region
    $region22: #{tpu_custom_call.1} parent=1 // pred_check
      _
    $region23: #{tpu_custom_call.1} parent=1 // pred_check_branch
      %45 = sbr.rel (0) target = $region25
    $region24: #{tpu_custom_call.1} parent=1 // pred_region
      %46 = dma.done [#allocation8], 2048
    $region25: #{tpu_custom_call.1} parent=1 // pred_fallthru
      _
    %p47 = scmp.eq.s32.totalorder 0, 0
    // Predicated region
    $region26: #{tpu_custom_call.1} parent=1 // pred_check
      %p48 = pneg %p47
    $region27: #{tpu_custom_call.1} parent=1 // pred_check_branch
      %50 = sbr.rel (%p48) target = $region29
    $region28: #{tpu_custom_call.1} parent=1 // pred_region
      %51 = vst [vmem:[#allocation2] sm:$0xff] 0.0
      %52 = vst [vmem:[#allocation2 + $0x8] sm:$0xff] 0.0
    $region29: #{tpu_custom_call.1} parent=1 // pred_fallthru
      _
    %v53 = vld [vmem:[#allocation2] sm:$0xff]
    %v54 = vld [vmem:[#allocation2 + $0x8] sm:$0xff]
    %v55 = vld [vmem:[#allocation4] sm:$0xff]
    %v56 = vld [vmem:[#allocation4 + $0x8] sm:$0xff]
    %v57 = vld [vmem:[#allocation7] sm:$0xff]
    %v58 = vld [vmem:[#allocation7 + $0x8] sm:$0xff]
    %v59 = vld [vmem:[#allocation7 + $0x10] sm:$0xff]
    %v60 = vld [vmem:[#allocation7 + $0x18] sm:$0xff]
    %v61 = vld [vmem:[#allocation7 + $0x20] sm:$0xff]
    %v62 = vld [vmem:[#allocation7 + $0x28] sm:$0xff]
    %v63 = vld [vmem:[#allocation7 + $0x30] sm:$0xff]
    %v64 = vld [vmem:[#allocation7 + $0x38] sm:$0xff]
    %v65 = vld [vmem:[#allocation7 + $0x40] sm:$0xff]
    %v66 = vld [vmem:[#allocation7 + $0x48] sm:$0xff]
    %v67 = vld [vmem:[#allocation7 + $0x50] sm:$0xff]
    %v68 = vld [vmem:[#allocation7 + $0x58] sm:$0xff]
    %v69 = vld [vmem:[#allocation7 + $0x60] sm:$0xff]
    %v70 = vld [vmem:[#allocation7 + $0x68] sm:$0xff]
    %v71 = vld [vmem:[#allocation7 + $0x70] sm:$0xff]
    %v72 = vld [vmem:[#allocation7 + $0x78] sm:$0xff]
    %73 = vmatprep.subr.mxu0 0.0
    %74 = vmatpush1.xpose.msra.mxu0 %v72
    %75 = vmatprep.subr.mxu0 0.0
    %76 = vmatpush1.xpose.msra.mxu0 %v71
    %77 = vmatprep.subr.mxu0 0.0
    %78 = vmatpush1.xpose.msra.mxu0 %v70
    %79 = vmatprep.subr.mxu0 0.0
    %80 = vmatpush1.xpose.msra.mxu0 %v69
    %81 = vmatprep.subr.mxu0 0.0
    %82 = vmatpush1.xpose.msra.mxu0 %v68
    %83 = vmatprep.subr.mxu0 0.0
    %84 = vmatpush1.xpose.msra.mxu0 %v67
    %85 = vmatprep.subr.mxu0 0.0
    %86 = vmatpush1.xpose.msra.mxu0 %v66
    %87 = vmatprep.subr.mxu0 0.0
    %88 = vmatpush1.xpose.msra.mxu0 %v65
    %89 = vmatprep.subr.mxu0 0.0
    %90 = vmatpush1.xpose.msra.mxu0 %v64
    %91 = vmatprep.subr.mxu0 0.0
    %92 = vmatpush1.xpose.msra.mxu0 %v63
    %93 = vmatprep.subr.mxu0 0.0
    %94 = vmatpush1.xpose.msra.mxu0 %v62
    %95 = vmatprep.subr.mxu0 0.0
    %96 = vmatpush1.xpose.msra.mxu0 %v61
    %97 = vmatprep.subr.mxu0 0.0
    %98 = vmatpush1.xpose.msra.mxu0 %v60
    %99 = vmatprep.subr.mxu0 0.0
    %100 = vmatpush1.xpose.msra.mxu0 %v59
    %101 = vmatprep.subr.mxu0 0.0
    %102 = vmatpush1.xpose.msra.mxu0 %v58
    %103 = vmatprep.subr.mxu0 0.0
    %104 = vmatpush1.xpose.msra.mxu0 %v57
    %105 = vmatprep.subr.mxu0 0.0
    %106 = vmatpush2.xpose.msra.mxu0 0.0
    %107 = vmatprep.subr.mxu0 0.0
    %108 = vmatpush2.xpose.msra.mxu0 0.0
    %109 = vmatprep.subr.mxu0 0.0
    %110 = vmatpush2.xpose.msra.mxu0 0.0
    %111 = vmatprep.subr.mxu0 0.0
    %112 = vmatpush2.xpose.msra.mxu0 0.0
    %113 = vmatprep.subr.mxu0 0.0
    %114 = vmatpush2.xpose.msra.mxu0 0.0
    %115 = vmatprep.subr.mxu0 0.0
    %116 = vmatpush2.xpose.msra.mxu0 0.0
    %117 = vmatprep.subr.mxu0 0.0
    %118 = vmatpush2.xpose.msra.mxu0 0.0
    %119 = vmatprep.subr.mxu0 0.0
    %120 = vmatpush2.xpose.msra.mxu0 0.0
    %121 = vmatprep.subr.mxu0 0.0
    %122 = vmatpush2.xpose.msra.mxu0 0.0
    %123 = vmatprep.subr.mxu0 0.0
    %124 = vmatpush2.xpose.msra.mxu0 0.0
    %125 = vmatprep.subr.mxu0 0.0
    %126 = vmatpush2.xpose.msra.mxu0 0.0
    %127 = vmatprep.subr.mxu0 0.0
    %128 = vmatpush2.xpose.msra.mxu0 0.0
    %129 = vmatprep.subr.mxu0 0.0
    %130 = vmatpush2.xpose.msra.mxu0 0.0
    %131 = vmatprep.subr.mxu0 0.0
    %132 = vmatpush2.xpose.msra.mxu0 0.0
    %133 = vmatprep.subr.mxu0 0.0
    %134 = vmatpush2.xpose.msra.mxu0 0.0
    %135 = vmatprep.subr.mxu0 0.0
    %136 = vmatpush2.xpose.msra.mxu0 0.0
    %137 = vmatprep.mubr.f32.mxu0 0.0
    %138 = vmatmul.mubr.f32.gmra.mxu0 %v55
    %v139 = vpop.f32.mrf.mxu0
    %v140 = vadd.f32 0.0, %v139
    %v141 = vpop.f32.mrf.mxu0
    %142 = vmatprep.mubr.f32.mxu0 0.0
    %143 = vmatmul.mubr.f32.gmra.mxu0 %v56
    %v144 = vpop.f32.mrf.mxu0
    %v145 = vadd.f32 0.0, %v144
    %v146 = vpop.f32.mrf.mxu0
    %147 = vdwg.mxu0
    %v148 = vadd.f32 %v53, %v140
    %v149 = vadd.f32 %v54, %v145
    %150 = vst [vmem:[#allocation2] sm:$0xff] %v148
    %151 = vst [vmem:[#allocation2 + $0x8] sm:$0xff] %v149
    // Predicated region
    $region30: #{tpu_custom_call.1} parent=1 // pred_check
      %p152 = pneg %p47
    $region31: #{tpu_custom_call.1} parent=1 // pred_check_branch
      %154 = sbr.rel (%p152) target = $region33
    $region32: #{tpu_custom_call.1} parent=1 // pred_region
      %s155 = sld [smem:[#allocation3]]
      %v156 = vld [vmem:[#allocation2] sm:$0xff]
      %v157 = vld [vmem:[#allocation2 + $0x8] sm:$0xff]
      %v158 = vstv %s155
      %v159 = vmul.f32 %v156, %v158
      %v160 = vmul.f32 %v157, %v158
      %v161 = vld [vmem:[%s3] sm:$0x1]
      %v163 = vlaneseq
      %v164 = vshrl.u32 %v163, 7
      %v165 = vsub.s32 0, %v164
      %v166 = vrot.slane %v161, %v165
      %v168 = vadd.f32 %v159, %v166
      %v169 = vadd.f32 %v160, %v166
      %170 = vst [vmem:[#allocation9] sm:$0xff] %v168
      %171 = vst [vmem:[#allocation9 + $0x8] sm:$0xff] %v169
    $region33: #{tpu_custom_call.1} parent=1 // pred_fallthru
      _
    // Predicated region
    $region34: #{tpu_custom_call.1} parent=1 // pred_check
      _
    $region35: #{tpu_custom_call.1} parent=1 // pred_check_branch
      %173 = sbr.rel (0) target = $region37
    $region36: #{tpu_custom_call.1} parent=1 // pred_region
      %s175 = ssub.s32 256, 256
      %176 = vsyncadd [#allocation6], %s175
      %s177 = sshll.u32 [#allocation9], 4
      %s178 = int_to_ptr.vmem [resolvable:$true] %s177
      %183 = dma.vmem_to_hbm [thread:$0]  %s178, 256, %s4, [#allocation6], 128, 128, 8
    $region37: #{tpu_custom_call.1} parent=1 // pred_fallthru
      _
    // Predicated region
    $region38: #{tpu_custom_call.1} parent=1 // pred_check
      _
    $region39: #{tpu_custom_call.1} parent=1 // pred_check_branch
      %185 = sbr.rel (0) target = $region41
    $region40: #{tpu_custom_call.1} parent=1 // pred_region
      %186 = dma.done [#allocation6], 256
    $region41: #{tpu_custom_call.1} parent=1 // pred_fallthru
      _
    %187 = vsyncpa [#allocation5], 1
    %188 = vsyncpa [#allocation8], 1
    %189 = vsyncpa [#allocation6], 1

</llo_original>
